<compile_context>
chip_gen: v7x
topology: tpu7x:2x2x1
jax: 0.10.0
libtpu: 0.0.40
codegen_flags: <defaults>
</compile_context>

<pallas_src>
import functools

import jax
import jax.numpy as jnp
from jax.experimental import pallas as pl
from jax.experimental.pallas import tpu as pltpu


def _masked_ce_kernel(logits_ref, tgt_ref, sum_ref, cnt_ref, *,
                      n_rows, row_tile, tiles_per_part):
    p = pl.program_id(0)   # partition axis ("parallel")
    j = pl.program_id(1)   # row-tile axis within partition ("arbitrary")

    # Per-partition accumulators live in the resident output block; reset at the
    # start of each partition's sweep over the row-tile axis.
    @pl.when(j == 0)
    def _():
        sum_ref[...] = jnp.zeros_like(sum_ref)
        cnt_ref[...] = jnp.zeros_like(cnt_ref)

    x = logits_ref[...].astype(jnp.float32)      # (TM, C)
    t = tgt_ref[...]                             # (TM, 1) int32; -1 == masked

    tm, c = x.shape

    # Logical (unclamped) global row index of each row in this tile.  Redundant
    # clamped grid steps and the out-of-bounds tail of the last partial tile get
    # rows >= n_rows and are excluded below, so unspecified/NaN tail data cannot
    # leak (jnp.where selects elementwise; NaN on the dropped branch is fine).
    tile_idx = p * tiles_per_part + j
    rows = tile_idx * row_tile + jax.lax.broadcasted_iota(jnp.int32, (tm, 1), 0)
    valid = jnp.logical_and(rows < n_rows, t >= 0)            # (TM, 1) bool

    # Stable log-sum-exp over the class (lane) dim.
    mx = jnp.max(x, axis=-1, keepdims=True)                   # (TM, 1)
    lse = mx + jnp.log(jnp.sum(jnp.exp(x - mx), axis=-1, keepdims=True))

    # Target-logit "gather" via lane-iota compare + select (no dynamic gather on
    # TPU); where() avoids a bool->f32 convert + full (TM,C) multiply.
    class_ids = jax.lax.broadcasted_iota(jnp.int32, (tm, c), 1)
    tgt_logit = jnp.sum(jnp.where(class_ids == t, x, 0.0), axis=-1, keepdims=True)

    per_row = lse - tgt_logit                                  # (TM, 1)

    sum_ref[...] += jnp.sum(jnp.where(valid, per_row, 0.0)).reshape(1, 1, 1)
    cnt_ref[...] += jnp.sum(valid.astype(jnp.float32)).reshape(1, 1, 1)


def _choose_row_tile(n_rows, n_classes, itemsize, requested):
    # Sub-32-bit dtypes pack along sublanes: bf16/f16 rows must tile by 16,
    # fp8/int8 by 32.  Full-array blocks (rt == n_rows) are always legal.
    mult = 8 if itemsize >= 4 else (16 if itemsize == 2 else 32)
    if requested is None:
        # ~2 MiB of f32 working set per block: well past the ~0.35us/step
        # overhead knee, and (block + double buffers + temporaries) stays far
        # under the 32 MiB scoped VMEM limit even for vocab-sized C.
        rt = max(mult, (2 * 1024 * 1024) // (4 * max(n_classes, 1)))
        rt = min(rt, 4096)
    else:
        rt = max(1, int(requested))
    if rt >= n_rows:
        return n_rows                    # single block == full array dim (always legal)
    return max(mult, (rt // mult) * mult)


@functools.partial(jax.jit, static_argnames=("use_masking", "row_tile", "num_parts"))
def mask_cross_entropy_loss(inputs, targets, olens=None, *, use_masking=True,
                            row_tile=None, num_parts=None):
    """Masked mean cross-entropy (matches MaskCrossEntropyLoss.forward).

    inputs:  (B, Lmax, C) float logits (any float dtype; kept native on the wire).
    targets: (B, Lmax) integer class ids.
    olens:   (B,) valid lengths per batch element (required if use_masking).
    """
    B, L, C = inputs.shape
    N = B * L

    logits = inputs.reshape(N, C)                      # free reshape, native dtype

    tgts = targets.reshape(N).astype(jnp.int32)
    if use_masking:
        assert olens is not None
        pos = jax.lax.broadcasted_iota(jnp.int32, (B, L), 1)
        valid = (pos < olens[:, None]).reshape(N)
        tgts = jnp.where(valid, tgts, -1)              # fuse mask into the targets
    tgts = tgts.reshape(N, 1)

    rt = _choose_row_tile(N, C, jnp.dtype(logits.dtype).itemsize, row_tile)
    num_tiles = int(pl.cdiv(N, rt))

    P = 2 if num_parts is None else int(num_parts)     # v7x: 2 TCs; harmless on v5e/v6e
    P = max(1, min(P, num_tiles))
    T = int(pl.cdiv(num_tiles, P))

    def in_map(p, j):
        # Clamp so redundant steps of the rectangular (P, T) grid re-read the
        # last tile; their contribution is excluded in-kernel (logical row idx).
        return (jnp.minimum(p * T + j, num_tiles - 1), 0)

    kernel = functools.partial(_masked_ce_kernel, n_rows=N, row_tile=rt,
                               tiles_per_part=T)

    sums, cnts = pl.pallas_call(
        kernel,
        out_shape=(jax.ShapeDtypeStruct((P, 1, 1), jnp.float32),
                   jax.ShapeDtypeStruct((P, 1, 1), jnp.float32)),
        grid_spec=pltpu.PrefetchScalarGridSpec(
            num_scalar_prefetch=0,
            grid=(P, T),
            in_specs=[
                pl.BlockSpec((rt, C), in_map),
                pl.BlockSpec((rt, 1), in_map),
            ],
            out_specs=[
                pl.BlockSpec((1, 1, 1), lambda p, j: (p, 0, 0)),
                pl.BlockSpec((1, 1, 1), lambda p, j: (p, 0, 0)),
            ],
        ),
        compiler_params=pltpu.CompilerParams(
            dimension_semantics=("parallel", "arbitrary"),
            vmem_limit_bytes=32 * 1024 * 1024,   # raises v5e's 16 MiB default
        ),
    )(logits, tgts)

    total = jnp.sum(sums)
    count = jnp.sum(cnts)
    # NOTE: torch CrossEntropyLoss(reduction='mean') over zero selected rows is
    # NaN; we guard the division and return 0.0 in that degenerate case.
    return jnp.where(count > 0, total / jnp.maximum(count, 1.0), 0.0)


def _reference(inputs, targets, olens=None):
    B, L, C = inputs.shape
    x = inputs.astype(jnp.float32)
    logz = jax.nn.logsumexp(x, axis=-1)
    tgt_logit = jnp.take_along_axis(x, targets[..., None], axis=-1)[..., 0]
    per = logz - tgt_logit
    if olens is None:
        return jnp.mean(per)
    pos = jnp.arange(L)[None, :]
    m = (pos < olens[:, None]).astype(jnp.float32)
    return jnp.sum(per * m) / jnp.sum(m)


if __name__ == "__main__":
    key = jax.random.PRNGKey(0)
    k1, k2, k3, k4, k5, k6 = jax.random.split(key, 6)

    # Test 1: f32 logits, single full block.
    B, Lmax, C = 2, 16, 32
    inputs = jax.random.normal(k1, (B, Lmax, C), dtype=jnp.float32)
    targets = jax.random.randint(k2, (B, Lmax), 0, C, dtype=jnp.int32)
    olens = jnp.array([16, 11], dtype=jnp.int32)
    loss = jax.block_until_ready(mask_cross_entropy_loss(inputs, targets, olens))
    ref = _reference(inputs, targets, olens)
    assert jnp.allclose(loss, ref, rtol=1e-4, atol=1e-4), (loss, ref)

    # Test 2: bf16 logits kept native on the wire, N not a multiple of 8/16.
    B2, L2, C2 = 3, 13, 24
    inputs2 = jax.random.normal(k3, (B2, L2, C2), dtype=jnp.float32).astype(jnp.bfloat16)
    targets2 = jax.random.randint(k4, (B2, L2), 0, C2, dtype=jnp.int32)
    olens2 = jnp.array([13, 7, 1], dtype=jnp.int32)
    loss2 = jax.block_until_ready(mask_cross_entropy_loss(inputs2, targets2, olens2))
    ref2 = _reference(inputs2.astype(jnp.float32), targets2, olens2)
    assert jnp.allclose(loss2, ref2, rtol=1e-4, atol=1e-4), (loss2, ref2)

    # Test 3: multi-tile grid with 2 partitions, a partial tail tile and one
    # redundant (clamped) grid step — exercises the in-kernel row masking.
    B3, L3, C3 = 3, 50, 32
    inputs3 = jax.random.normal(k5, (B3, L3, C3), dtype=jnp.float32)
    targets3 = jax.random.randint(k6, (B3, L3), 0, C3, dtype=jnp.int32)
    olens3 = jnp.array([50, 37, 12], dtype=jnp.int32)
    loss3 = jax.block_until_ready(
        mask_cross_entropy_loss(inputs3, targets3, olens3, row_tile=8))
    ref3 = _reference(inputs3, targets3, olens3)
    assert jnp.allclose(loss3, ref3, rtol=1e-4, atol=1e-4), (loss3, ref3)

    # Test 4: use_masking=False path (plain mean CE over every position).
    loss4 = jax.block_until_ready(
        mask_cross_entropy_loss(inputs, targets, use_masking=False))
    ref4 = _reference(inputs, targets, None)
    assert jnp.allclose(loss4, ref4, rtol=1e-4, atol=1e-4), (loss4, ref4)

    print("KERNEL_OK")
</pallas_src>

<mosaic_0001>
module attributes {stable_mosaic.version = 11 : i64} {
  func.func @_masked_ce_kernel(%arg0: i32, %arg1: i32, %arg2: memref<32x32xf32, #tpu.memory_space<vmem>>, %arg3: memref<32x1xi32, #tpu.memory_space<vmem>>, %arg4: memref<1x1x1xf32, #tpu.memory_space<vmem>>, %arg5: memref<1x1x1xf32, #tpu.memory_space<vmem>>) attributes {dimension_semantics = [#tpu.dimension_semantics<parallel>, #tpu.dimension_semantics<arbitrary>], iteration_bounds = array<i64: 1, 1>, scalar_prefetch = 0 : i64, scratch_operands = 0 : i64, tpu.core_type = #tpu.core_type<tc>, window_params = [{transform_indices = @transform_0, window_bounds = array<i64: 32, 32>}, {transform_indices = @transform_1, window_bounds = array<i64: 32, 1>}, {transform_indices = @transform_2, window_bounds = array<i64: 1, 1, 1>}, {transform_indices = @transform_3, window_bounds = array<i64: 1, 1, 1>}]} {
    %c0_i32 = arith.constant 0 : i32
    %0 = arith.cmpi eq, %arg1, %c0_i32 : i32
    %1 = arith.extui %0 : i1 to i32
    %c0_i32_0 = arith.constant 0 : i32
    %2 = arith.cmpi ne, %1, %c0_i32_0 : i32
    scf.if %2 {
      %cst_24 = arith.constant 0.000000e+00 : f32
      %53 = vector.broadcast %cst_24 : f32 to vector<1x1x1xf32>
      %c0_25 = arith.constant 0 : index
      %c0_26 = arith.constant 0 : index
      %c0_27 = arith.constant 0 : index
      %54 = vector.load %arg4[%c0_25, %c0_26, %c0_27] : memref<1x1x1xf32, #tpu.memory_space<vmem>>, vector<1x1x1xf32>
      tpu.vector_store %arg4[%c0_25, %c0_26, %c0_27], %53 {strides = array<i32>} : memref<1x1x1xf32, #tpu.memory_space<vmem>>, vector<1x1x1xf32>,
      %cst_28 = arith.constant 0.000000e+00 : f32
      %55 = vector.broadcast %cst_28 : f32 to vector<1x1x1xf32>
      %c0_29 = arith.constant 0 : index
      %c0_30 = arith.constant 0 : index
      %c0_31 = arith.constant 0 : index
      %56 = vector.load %arg5[%c0_29, %c0_30, %c0_31] : memref<1x1x1xf32, #tpu.memory_space<vmem>>, vector<1x1x1xf32>
      tpu.vector_store %arg5[%c0_29, %c0_30, %c0_31], %55 {strides = array<i32>} : memref<1x1x1xf32, #tpu.memory_space<vmem>>, vector<1x1x1xf32>,
    } else {
    }
    %c0 = arith.constant 0 : index
    %c0_1 = arith.constant 0 : index
    %3 = vector.load %arg2[%c0, %c0_1] : memref<32x32xf32, #tpu.memory_space<vmem>>, vector<32x32xf32>
    %c0_2 = arith.constant 0 : index
    %c0_3 = arith.constant 0 : index
    %4 = vector.load %arg3[%c0_2, %c0_3] : memref<32x1xi32, #tpu.memory_space<vmem>>, vector<32x1xi32>
    %c1_i32 = arith.constant 1 : i32
    %5 = arith.muli %arg0, %c1_i32 : i32
    %6 = arith.addi %5, %arg1 : i32
    %c32_i32 = arith.constant 32 : i32
    %7 = arith.muli %6, %c32_i32 : i32
    %8 = tpu.iota {dimensions = array<i32: 0>} : vector<32x1xi32>
    %9 = vector.broadcast %7 : i32 to vector<32x1xi32>
    %10 = arith.addi %9, %8 : vector<32x1xi32>
    %c32_i32_4 = arith.constant 32 : i32
    %11 = vector.broadcast %c32_i32_4 : i32 to vector<32x1xi32>
    %12 = arith.cmpi slt, %10, %11 : vector<32x1xi32>
    %c0_i32_5 = arith.constant 0 : i32
    %13 = vector.broadcast %c0_i32_5 : i32 to vector<32x1xi32>
    %14 = arith.cmpi sge, %4, %13 : vector<32x1xi32>
    %15 = arith.andi %12, %14 : vector<32x1xi1>
    %cst = arith.constant dense<0xFF800000> : vector<32xf32>
    %16 = vector.multi_reduction <maximumf>, %3, %cst [1] : vector<32x32xf32> to vector<32xf32>
    %17 = vector.shape_cast %16 : vector<32xf32> to vector<32x1xf32>
    %18 = vector.broadcast %17 : vector<32x1xf32> to vector<32x32xf32>
    %19 = arith.subf %3, %18 : vector<32x32xf32>
    %20 = math.exp %19 : vector<32x32xf32>
    %cst_6 = arith.constant dense<0.000000e+00> : vector<32xf32>
    %21 = vector.multi_reduction <add>, %20, %cst_6 [1] : vector<32x32xf32> to vector<32xf32>
    %22 = vector.shape_cast %21 : vector<32xf32> to vector<32x1xf32>
    %23 = math.log %22 : vector<32x1xf32>
    %24 = arith.addf %17, %23 : vector<32x1xf32>
    %25 = tpu.iota {dimensions = array<i32: 1>} : vector<32x32xi32>
    %26 = vector.broadcast %4 : vector<32x1xi32> to vector<32x32xi32>
    %27 = arith.cmpi eq, %25, %26 : vector<32x32xi32>
    %cst_7 = arith.constant 0.000000e+00 : f32
    %28 = vector.broadcast %cst_7 : f32 to vector<32x32xf32>
    %29 = arith.select %27, %3, %28 : vector<32x32xi1>, vector<32x32xf32>
    %cst_8 = arith.constant dense<0.000000e+00> : vector<32xf32>
    %30 = vector.multi_reduction <add>, %29, %cst_8 [1] : vector<32x32xf32> to vector<32xf32>
    %31 = vector.shape_cast %30 : vector<32xf32> to vector<32x1xf32>
    %32 = arith.subf %24, %31 : vector<32x1xf32>
    %c0_9 = arith.constant 0 : index
    %c0_10 = arith.constant 0 : index
    %c0_11 = arith.constant 0 : index
    %33 = vector.load %arg4[%c0_9, %c0_10, %c0_11] : memref<1x1x1xf32, #tpu.memory_space<vmem>>, vector<1x1x1xf32>
    %cst_12 = arith.constant 0.000000e+00 : f32
    %34 = vector.broadcast %cst_12 : f32 to vector<32x1xf32>
    %35 = arith.select %15, %32, %34 : vector<32x1xi1>, vector<32x1xf32>
    %36 = vector.shape_cast %35 : vector<32x1xf32> to vector<1x32x1xf32>
    %cst_13 = arith.constant dense<0.000000e+00> : vector<1xf32>
    %37 = vector.multi_reduction <add>, %36, %cst_13 [1, 2] : vector<1x32x1xf32> to vector<1xf32>
    %38 = vector.shape_cast %37 : vector<1xf32> to vector<1x1x1xf32>
    %39 = vector.extract %38[0, 0, 0] : f32 from vector<1x1x1xf32>
    %40 = vector.broadcast %39 : f32 to vector<1x1x1xf32>
    %41 = arith.addf %33, %40 : vector<1x1x1xf32>
    %c0_14 = arith.constant 0 : index
    %c0_15 = arith.constant 0 : index
    %c0_16 = arith.constant 0 : index
    %42 = vector.load %arg4[%c0_14, %c0_15, %c0_16] : memref<1x1x1xf32, #tpu.memory_space<vmem>>, vector<1x1x1xf32>
    tpu.vector_store %arg4[%c0_14, %c0_15, %c0_16], %41 {strides = array<i32>} : memref<1x1x1xf32, #tpu.memory_space<vmem>>, vector<1x1x1xf32>,
    %c0_17 = arith.constant 0 : index
    %c0_18 = arith.constant 0 : index
    %c0_19 = arith.constant 0 : index
    %43 = vector.load %arg5[%c0_17, %c0_18, %c0_19] : memref<1x1x1xf32, #tpu.memory_space<vmem>>, vector<1x1x1xf32>
    %44 = arith.extui %15 : vector<32x1xi1> to vector<32x1xi32>
    %45 = arith.sitofp %44 : vector<32x1xi32> to vector<32x1xf32>
    %46 = vector.shape_cast %45 : vector<32x1xf32> to vector<1x32x1xf32>
    %cst_20 = arith.constant dense<0.000000e+00> : vector<1xf32>
    %47 = vector.multi_reduction <add>, %46, %cst_20 [1, 2] : vector<1x32x1xf32> to vector<1xf32>
    %48 = vector.shape_cast %47 : vector<1xf32> to vector<1x1x1xf32>
    %49 = vector.extract %48[0, 0, 0] : f32 from vector<1x1x1xf32>
    %50 = vector.broadcast %49 : f32 to vector<1x1x1xf32>
    %51 = arith.addf %43, %50 : vector<1x1x1xf32>
    %c0_21 = arith.constant 0 : index
    %c0_22 = arith.constant 0 : index
    %c0_23 = arith.constant 0 : index
    %52 = vector.load %arg5[%c0_21, %c0_22, %c0_23] : memref<1x1x1xf32, #tpu.memory_space<vmem>>, vector<1x1x1xf32>
    tpu.vector_store %arg5[%c0_21, %c0_22, %c0_23], %51 {strides = array<i32>} : memref<1x1x1xf32, #tpu.memory_space<vmem>>, vector<1x1x1xf32>,
    return
  }
  func.func @transform_0(%arg0: i32, %arg1: i32) -> (i32, i32) {
    %c1_i32 = arith.constant 1 : i32
    %0 = arith.muli %arg0, %c1_i32 : i32
    %1 = arith.addi %0, %arg1 : i32
    %c0_i32 = arith.constant 0 : i32
    %2 = arith.minsi %1, %c0_i32 : i32
    %c0_i32_0 = arith.constant 0 : i32
    %c0_i32_1 = arith.constant 0 : i32
    return %2, %c0_i32_0 : i32, i32
  }
  func.func @transform_1(%arg0: i32, %arg1: i32) -> (i32, i32) {
    %c1_i32 = arith.constant 1 : i32
    %0 = arith.muli %arg0, %c1_i32 : i32
    %1 = arith.addi %0, %arg1 : i32
    %c0_i32 = arith.constant 0 : i32
    %2 = arith.minsi %1, %c0_i32 : i32
    %c0_i32_0 = arith.constant 0 : i32
    %c0_i32_1 = arith.constant 0 : i32
    return %2, %c0_i32_0 : i32, i32
  }
  func.func @transform_2(%arg0: i32, %arg1: i32) -> (i32, i32, i32) {
    %c0_i32 = arith.constant 0 : i32
    %c0_i32_0 = arith.constant 0 : i32
    %c0_i32_1 = arith.constant 0 : i32
    return %arg0, %c0_i32, %c0_i32_0 : i32, i32, i32
  }
  func.func @transform_3(%arg0: i32, %arg1: i32) -> (i32, i32, i32) {
    %c0_i32 = arith.constant 0 : i32
    %c0_i32_0 = arith.constant 0 : i32
    %c0_i32_1 = arith.constant 0 : i32
    return %arg0, %c0_i32, %c0_i32_0 : i32, i32, i32
  }
}

</mosaic_0001>

<llo_original>
// kernel: mask_cross_entropy_loss.1
$region0: #{mask_cross_entropy_loss.1}
  #allocation0 [shape = 'u32[]', space=smem, size = 0x4, offset = 0x4, fixed_abs, tag = 'smem constant byte address 0x4 - core index']
  #allocation1 [shape = 'u32[144,128]{1,0:T(1,128)}', space=vmem, size = 0x12000, scoped, tag = 'internal scratch']
  %s0 = inlined_call_operand.vmem [shape: f32[32,32], index: 0, kind: input, shape index: {}]
  %s1 = inlined_call_operand.vmem [shape: s32[32,1], index: 1, kind: input, shape index: {}]
  %s2 = inlined_call_operand.hbm [shape: f32[1,1,1], index: 2, kind: output, shape index: {0}]
  %s3 = inlined_call_operand.hbm [shape: f32[1,1,1], index: 3, kind: output, shape index: {1}]
  %4 = xla_tuple %s2, %s3
  %s5 = sld [smem:[#allocation0]]
  $region30: #{mask_cross_entropy_loss.1} parent=0
    _
  %s7 = ssub.s32 1, %s5
  %s8 = scalar_select 0, %s7, %s5
  $region1: #{mask_cross_entropy_loss.1} parent=0
    #allocation2 [shape = 'u8[512]{0}', space=vmem, size = 0x400, scoped, tag = 'output window, operand 0, single buffered']
    #allocation3 [shape = 's32[1]{0}', space=sflag, size = 0x4, scoped, tag = 'scoped memory for mask_cross_entropy_loss.1']
    #allocation4 [shape = 'u8[512]{0}', space=vmem, size = 0x400, scoped, tag = 'output window, operand 1, single buffered']
    #allocation5 [shape = 's32[1]{0}', space=sflag, size = 0x4, scoped, tag = 'scoped memory for mask_cross_entropy_loss.1']
    %9 = vsyncpa [#allocation3], 0
    %10 = vsyncpa [#allocation5], 0
    // Predicated region
    $region2: #{mask_cross_entropy_loss.1} parent=1 // pred_check
      _
    $region3: #{mask_cross_entropy_loss.1} parent=1 // pred_check_branch
      %12 = sbr.rel (0) target = $region5
    $region4: #{mask_cross_entropy_loss.1} parent=1 // pred_region
      %s13 = sadd.s32 0, 0
      %p14 = scmp.lt.s32.totalorder %s13, 0
      %s15 = scalar_select %p14, %s13, 0
      %s16 = smul.u32 4, %s15
      %p17 = scmp.lt.s32.totalorder %s16, 3
      %s18 = scalar_select %p17, %s16, 3
      %s19 = smul.addr %s18, 8
      %s20 = scalar_lea.vmem %s0, %s19
      %s21 = sadd.s32 0, 0
      %p22 = scmp.lt.s32.totalorder %s21, 0
      %s23 = scalar_select %p22, %s21, 0
      %s24 = smul.u32 4, %s23
    $region5: #{mask_cross_entropy_loss.1} parent=1 // pred_fallthru
      _
    // Predicated region
    $region6: #{mask_cross_entropy_loss.1} parent=1 // pred_check
      _
    $region7: #{mask_cross_entropy_loss.1} parent=1 // pred_check_branch
      %26 = sbr.rel (0) target = $region9
    $region8: #{mask_cross_entropy_loss.1} parent=1 // pred_region
      %s27 = sadd.s32 0, 0
      %p28 = scmp.lt.s32.totalorder %s27, 0
      %s29 = scalar_select %p28, %s27, 0
      %s30 = smul.u32 4, %s29
      %p31 = scmp.lt.s32.totalorder %s30, 3
      %s32 = scalar_select %p31, %s30, 3
      %s33 = smul.addr %s32, 8
      %s34 = scalar_lea.vmem %s1, %s33
      %s35 = sadd.s32 0, 0
      %p36 = scmp.lt.s32.totalorder %s35, 0
      %s37 = scalar_select %p36, %s35, 0
      %s38 = smul.u32 4, %s37
    $region9: #{mask_cross_entropy_loss.1} parent=1 // pred_fallthru
      _
    %s39 = sadd.s32 0, 0
    %p40 = scmp.lt.s32.totalorder %s39, 0
    %s41 = scalar_select %p40, %s39, 0
    %s42 = smul.u32 4, %s41
    %p43 = scmp.lt.s32.totalorder %s42, 3
    %s44 = scalar_select %p43, %s42, 3
    %s45 = smul.addr %s44, 8
    %s46 = scalar_lea.vmem %s0, %s45
    %s47 = sadd.s32 0, 0
    %p48 = scmp.lt.s32.totalorder %s47, 0
    %s49 = scalar_select %p48, %s47, 0
    %s50 = smul.u32 4, %s49
    %p51 = scmp.lt.s32.totalorder %s50, 3
    %s52 = scalar_select %p51, %s50, 3
    %s53 = smul.addr %s52, 8
    %s54 = scalar_lea.vmem %s1, %s53
    %s55 = sadd.s32 0, 0
    %p56 = scmp.lt.s32.totalorder %s55, 0
    %s57 = scalar_select %p56, %s55, 0
    %s58 = smul.u32 4, %s57
    %p59 = scmp.lt.s32.totalorder %s58, 3
    %s60 = scalar_select %p59, %s58, 3
    %s61 = smul.addr %s60, 8
    %s62 = scalar_lea.vmem %s0, %s61
    %s63 = sadd.s32 0, 0
    %p64 = scmp.lt.s32.totalorder %s63, 0
    %s65 = scalar_select %p64, %s63, 0
    %s66 = smul.u32 4, %s65
    %s67 = sadd.s32 0, 0
    %p68 = scmp.lt.s32.totalorder %s67, 0
    %s69 = scalar_select %p68, %s67, 0
    %s70 = smul.u32 4, %s69
    %p71 = scmp.lt.s32.totalorder %s70, 3
    %s72 = scalar_select %p71, %s70, 3
    %s73 = smul.addr %s72, 8
    %s74 = scalar_lea.vmem %s1, %s73
    %s75 = sadd.s32 0, 0
    %p76 = scmp.lt.s32.totalorder %s75, 0
    %s77 = scalar_select %p76, %s75, 0
    %s78 = smul.u32 4, %s77
    %p79 = scmp.eq.s32.totalorder 0, 0
    // Predicated region
    $region10: #{mask_cross_entropy_loss.1} parent=1 // pred_check
      %p80 = pneg %p79
    $region11: #{mask_cross_entropy_loss.1} parent=1 // pred_check_branch
      %82 = sbr.rel (%p80) target = $region13
    $region12: #{mask_cross_entropy_loss.1} parent=1 // pred_region
      %vm83 = vcmask 0
      %84 = vst.msk [vmem:[#allocation2] sm:$0x1] %vm83, 0.0
      %85 = vst.msk [vmem:[#allocation4] sm:$0x1] %vm83, 0.0
    $region13: #{mask_cross_entropy_loss.1} parent=1 // pred_fallthru
      _
    %v86 = vld [vmem:[%s62] sm:$0xff]
    %v87 = vld [vmem:[%s62 + $0x8] sm:$0xff]
    %v88 = vld [vmem:[%s62 + $0x10] sm:$0xff]
    %v89 = vld [vmem:[%s62 + $0x18] sm:$0xff]
    %v90 = vld [vmem:[%s74] sm:$0xff]
    %v91 = vld [vmem:[%s74 + $0x8] sm:$0xff]
    %v92 = vld [vmem:[%s74 + $0x10] sm:$0xff]
    %v93 = vld [vmem:[%s74 + $0x18] sm:$0xff]
    %s94 = sadd.s32 0, 0
    %s95 = smul.u32 %s94, 32
    %v96 = vlaneseq
    %v97 = vshrl.u32 %v96, 7
    %v98 = vadd.s32 %v97, 8
    %v99 = vadd.s32 %v97, 16
    %v100 = vadd.s32 %v97, 24
    %v101 = vstv %s95
    %v102 = vadd.s32 %v101, %v97
    %v103 = vadd.s32 %v101, %v98
    %v104 = vadd.s32 %v101, %v99
    %v105 = vadd.s32 %v101, %v100
    %vm106 = vcmp.lt.s32.totalorder %v102, 32
    %vm107 = vcmp.lt.s32.totalorder %v103, 32
    %vm108 = vcmp.lt.s32.totalorder %v104, 32
    %vm109 = vcmp.lt.s32.totalorder %v105, 32
    %vm110 = vcmp.ge.s32.totalorder %v90, 0
    %vm111 = vcmp.ge.s32.totalorder %v91, 0
    %vm112 = vcmp.ge.s32.totalorder %v92, 0
    %vm113 = vcmp.ge.s32.totalorder %v93, 0
    %vm114 = vmand %vm106, %vm110
    %vm115 = vmand %vm107, %vm111
    %vm116 = vmand %vm108, %vm112
    %vm117 = vmand %vm109, %vm113
    %vm118 = vcmask 261120
    %v119 = vsel %vm118, %v86, -inf
    %120 = vmax.xlane.f32.xlu0 %v119
    %v121 = vpop.xlane.xlu0 %120
    %v122 = vsel %vm118, %v87, -inf
    %123 = vmax.xlane.f32.xlu0 %v122
    %v124 = vpop.xlane.xlu0 %123
    %v125 = vsel %vm118, %v88, -inf
    %126 = vmax.xlane.f32.xlu0 %v125
    %v127 = vpop.xlane.xlu0 %126
    %v128 = vsel %vm118, %v89, -inf
    %129 = vmax.xlane.f32.xlu0 %v128
    %v130 = vpop.xlane.xlu0 %129
    %v131 = vsub.f32 %v86, %v121
    %v132 = vsub.f32 %v87, %v124
    %v133 = vsub.f32 %v88, %v127
    %v134 = vsub.f32 %v89, %v130
    %v135 = vmul.f32 %v131, 1.442695
    %v136 = vpow.pop %v135
    %v137 = vmul.f32 %v132, 1.442695
    %v138 = vpow.pop %v137
    %v139 = vmul.f32 %v133, 1.442695
    %v140 = vpow.pop %v139
    %v141 = vmul.f32 %v134, 1.442695
    %v142 = vpow.pop %v141
    %v143 = vsel %vm118, %v136, 0.0
    %144 = vadd.xlane.f32.xlu0 %v143
    %v145 = vpop.xlane.xlu0 %144
    %v146 = vsel %vm118, %v138, 0.0
    %147 = vadd.xlane.f32.xlu0 %v146
    %v148 = vpop.xlane.xlu0 %147
    %v149 = vsel %vm118, %v140, 0.0
    %150 = vadd.xlane.f32.xlu0 %v149
    %v151 = vpop.xlane.xlu0 %150
    %v152 = vsel %vm118, %v142, 0.0
    %153 = vadd.xlane.f32.xlu0 %v152
    %v154 = vpop.xlane.xlu0 %153
    %v155 = vlog2.pop %v145
    %v156 = vmul.f32 %v155, 0.6931472
    %v157 = vlog2.pop %v148
    %v158 = vmul.f32 %v157, 0.6931472
    %v159 = vlog2.pop %v151
    %v160 = vmul.f32 %v159, 0.6931472
    %v161 = vlog2.pop %v154
    %v162 = vmul.f32 %v161, 0.6931472
    %v163 = vadd.f32 %v121, %v156
    %v164 = vadd.f32 %v124, %v158
    %v165 = vadd.f32 %v127, %v160
    %v166 = vadd.f32 %v130, %v162
    %v167 = vlaneseq
    %v168 = vand.u32 %v167, 127
    %169 = vset.pattern.permute.xlu0 0
    %170 = vperm.xlu0 %169, %v90
    %v171 = vpop.permute.xlu0 %170
    %172 = vset.pattern.permute.xlu0 0
    %173 = vperm.xlu0 %172, %v91
    %v174 = vpop.permute.xlu0 %173
    %175 = vset.pattern.permute.xlu0 0
    %176 = vperm.xlu0 %175, %v92
    %v177 = vpop.permute.xlu0 %176
    %178 = vset.pattern.permute.xlu0 0
    %179 = vperm.xlu0 %178, %v93
    %v180 = vpop.permute.xlu0 %179
    %vm181 = vcmp.eq.s32.totalorder %v168, %v171
    %vm182 = vcmp.eq.s32.totalorder %v168, %v174
    %vm183 = vcmp.eq.s32.totalorder %v168, %v177
    %vm184 = vcmp.eq.s32.totalorder %v168, %v180
    %v185 = vsel %vm181, %v86, 0.0
    %v186 = vsel %vm182, %v87, 0.0
    %v187 = vsel %vm183, %v88, 0.0
    %v188 = vsel %vm184, %v89, 0.0
    %v189 = vsel %vm118, %v185, 0.0
    %190 = vadd.xlane.f32.xlu0 %v189
    %v191 = vpop.xlane.xlu0 %190
    %v192 = vsel %vm118, %v186, 0.0
    %193 = vadd.xlane.f32.xlu0 %v192
    %v194 = vpop.xlane.xlu0 %193
    %v195 = vsel %vm118, %v187, 0.0
    %196 = vadd.xlane.f32.xlu0 %v195
    %v197 = vpop.xlane.xlu0 %196
    %v198 = vsel %vm118, %v188, 0.0
    %199 = vadd.xlane.f32.xlu0 %v198
    %v200 = vpop.xlane.xlu0 %199
    %v201 = vsub.f32 %v163, %v191
    %v202 = vsub.f32 %v164, %v194
    %v203 = vsub.f32 %v165, %v197
    %v204 = vsub.f32 %v166, %v200
    %v205 = vld [vmem:[#allocation2] sm:$0x1]
    %v206 = vsel %vm114, %v201, 0.0
    %v207 = vsel %vm115, %v202, 0.0
    %v208 = vsel %vm116, %v203, 0.0
    %v209 = vsel %vm117, %v204, 0.0
    %vm210 = vcmask 7168
    %v211 = vsel %vm210, %v206, 0.0
    %v212 = vsel %vm210, %v207, 0.0
    %v213 = vadd.f32 %v211, %v212
    %v214 = vsel %vm210, %v208, 0.0
    %v215 = vadd.f32 %v213, %v214
    %v216 = vsel %vm210, %v209, 0.0
    %v217 = vadd.f32 %v215, %v216
    %218 = vadd.xlane.f32.xlu0 %v217
    %v219 = vpop.xlane.xlu0 %218
    %v220 = vrot.slane %v219, 4
    %v221 = vadd.f32 %v219, %v220
    %v222 = vrot.slane %v221, 2
    %v223 = vadd.f32 %v221, %v222
    %v224 = vrot.slane %v223, 1
    %v225 = vadd.f32 %v223, %v224
    %s226 = vtos %v225
    %v227 = vstv %s226
    %v228 = vadd.f32 %v205, %v227
    %vm229 = vcmask 0
    %230 = vst.msk [vmem:[#allocation2] sm:$0x1] %vm229, %v228
    %v231 = vld [vmem:[#allocation4] sm:$0x1]
    %v232 = vsel %vm114, 1, 0
    %v233 = vsel %vm115, 1, 0
    %v234 = vsel %vm116, 1, 0
    %v235 = vsel %vm117, 1, 0
    %v236 = vcvt.s32.f32 %v232
    %v237 = vcvt.s32.f32 %v233
    %v238 = vcvt.s32.f32 %v234
    %v239 = vcvt.s32.f32 %v235
    %v240 = vsel %vm210, %v236, 0.0
    %v241 = vsel %vm210, %v237, 0.0
    %v242 = vadd.f32 %v240, %v241
    %v243 = vsel %vm210, %v238, 0.0
    %v244 = vadd.f32 %v242, %v243
    %v245 = vsel %vm210, %v239, 0.0
    %v246 = vadd.f32 %v244, %v245
    %247 = vadd.xlane.f32.xlu0 %v246
    %v248 = vpop.xlane.xlu0 %247
    %v249 = vrot.slane %v248, 4
    %v250 = vadd.f32 %v248, %v249
    %v251 = vrot.slane %v250, 2
    %v252 = vadd.f32 %v250, %v251
    %v253 = vrot.slane %v252, 1
    %v254 = vadd.f32 %v252, %v253
    %s255 = vtos %v254
    %v256 = vstv %s255
    %v257 = vadd.f32 %v231, %v256
    %258 = vst.msk [vmem:[#allocation4] sm:$0x1] %vm229, %v257
    // Predicated region
    $region14: #{mask_cross_entropy_loss.1} parent=1 // pred_check
      _
    $region15: #{mask_cross_entropy_loss.1} parent=1 // pred_check_branch
      %260 = sbr.rel (0) target = $region17
    $region16: #{mask_cross_entropy_loss.1} parent=1 // pred_region
      %s262 = ssub.s32 16, 16
      %263 = vsyncadd [#allocation3], %s262
      %s265 = sshll.u32 [#allocation2], 4
      %s266 = int_to_ptr.vmem [resolvable:$true] %s265
      %268 = dma.vmem_to_hbm [thread:$0]  %s266, 16, %s2, [#allocation3]
    $region17: #{mask_cross_entropy_loss.1} parent=1 // pred_fallthru
      _
    // Predicated region
    $region18: #{mask_cross_entropy_loss.1} parent=1 // pred_check
      _
    $region19: #{mask_cross_entropy_loss.1} parent=1 // pred_check_branch
      %270 = sbr.rel (0) target = $region21
    $region20: #{mask_cross_entropy_loss.1} parent=1 // pred_region
      %s272 = ssub.s32 16, 16
      %273 = vsyncadd [#allocation5], %s272
      %s275 = sshll.u32 [#allocation4], 4
      %s276 = int_to_ptr.vmem [resolvable:$true] %s275
      %278 = dma.vmem_to_hbm [thread:$0]  %s276, 16, %s3, [#allocation5]
    $region21: #{mask_cross_entropy_loss.1} parent=1 // pred_fallthru
      _
    // Predicated region
    $region22: #{mask_cross_entropy_loss.1} parent=1 // pred_check
      _
    $region23: #{mask_cross_entropy_loss.1} parent=1 // pred_check_branch
      %280 = sbr.rel (0) target = $region25
    $region24: #{mask_cross_entropy_loss.1} parent=1 // pred_region
      %281 = dma.done [#allocation3], 16
    $region25: #{mask_cross_entropy_loss.1} parent=1 // pred_fallthru
      _
    // Predicated region
    $region26: #{mask_cross_entropy_loss.1} parent=1 // pred_check
      _
    $region27: #{mask_cross_entropy_loss.1} parent=1 // pred_check_branch
      %283 = sbr.rel (0) target = $region29
    $region28: #{mask_cross_entropy_loss.1} parent=1 // pred_region
      %284 = dma.done [#allocation5], 16
    $region29: #{mask_cross_entropy_loss.1} parent=1 // pred_fallthru
      _
    %285 = vsyncpa [#allocation3], 1
    %286 = vsyncpa [#allocation5], 1

</llo_original>
